<compile_context>
chip_gen: v5e
topology: v5e:2x2
jax: 0.10.0
libtpu: 0.0.40
codegen_flags: <defaults>
</compile_context>

<pallas_src>
import jax
import jax.numpy as jnp
import numpy as np
from jax.experimental import pallas as pl
from jax.experimental.pallas import tpu as pltpu

# ---- static configuration (mirrors module defaults) ------------------------
CATEGORICAL_P = 0.1
ORDERED_P = 0.7
KEEP_ACTIVATION_SIZE = False          # module default
NUM_CLASSES = 4                       # deterministic stand-in for zipf_sampler_f(0.8, 1, 10)()


def _round_up(n, m):
    return ((n + m - 1) // m) * m


def _choose_tile(N, strip_w, max_tile, min_steps=4):
    """Largest multiple of strip_w <= max_tile; shrink to give the pipeline
    (and the 2 v7x TensorCores, via dimension_semantics=('parallel',)) at
    least `min_steps` grid steps when N allows it."""
    tile = min(max_tile, _round_up(N, strip_w))
    while tile > strip_w and pl.cdiv(N, tile) < min_steps:
        tile -= strip_w
    return tile


def _make_kernel(S, tile_n, strip_w, n_words, num_classes, keep_activation_size):
    ncm1 = num_classes - 1
    half_nc = num_classes / 2.0
    # At ordered positions x1 = count - nc/2 with count in {0..nc-1}, so only
    # classes c < nc - nc//2 can ever match in randomize_classes.
    max_match_class = num_classes - num_classes // 2
    n_strips = tile_n // strip_w

    def kernel(perm_ref, x_ref, pk_ref, o_ref):
        # Class permutation scalars: read once per grid step from SMEM,
        # reused by every strip (hoisted out of the strip loop).
        perm_f = [perm_ref[c].astype(jnp.float32) for c in range(max_match_class)]
        # Sublane-index iota is strip-invariant -> hoist (JAX does not CSE
        # broadcast_in_dim).
        iota_s = jax.lax.broadcasted_iota(jnp.int32, (S, strip_w), 0)

        # Strip-mined over the lane axis: the BlockSpec tile (DMA granularity)
        # is large, but the arithmetic working width is strip_w lanes.  The
        # loop is fully unrolled with static 128-aligned offsets (equivalent
        # to lax.fori_loop(..., unroll=True) but every slice is static).
        for s in range(n_strips):
            off = s * strip_w
            x = x_ref[:, off:off + strip_w]               # (S, W) f32
            xs = x / (1.0 + jnp.abs(x))                   # softsign (plain, exact divide)

            pk = pk_ref[:, off:off + strip_w]             # (n_words, W) uint32

            def byte_at(b):                               # unpack byte b of the packed stream
                w, sh = divmod(b, 4)
                return ((pk[w:w + 1, :] >> (8 * sh)) & 0xFF).astype(jnp.int32)  # (1, W)

            code = byte_at(0)                             # 0 plain / 1 cat / 2 cat+ordered
            cat = code > 0
            ordm = code > 1

            # class_boundaries[k, n] = xs[ind[k, n], n] via one-hot over the S
            # (sublane) axis + masked XLU reduce; count how many boundaries
            # each sample exceeds (int accumulation, one convert at the end).
            count = jnp.zeros((S, strip_w), jnp.int32)
            for k in range(ncm1):
                ind_k = byte_at(k + 1)                    # (1, W) boundary sample index
                onehot = ind_k == iota_s                  # (S, W)
                bnd_k = jnp.sum(jnp.where(onehot, xs, 0.0), axis=0, keepdims=True)
                count = count + (xs > bnd_k).astype(jnp.int32)

            # replace categorical positions with (count - num_classes/2)
            x1 = jnp.where(cat, count.astype(jnp.float32) - half_nc, xs)

            # randomize_classes on ordered positions: v -> sum_c (v == c) * perm[c];
            # values outside {0..nc-1} map to 0, exactly as in the PyTorch module.
            remap = jnp.zeros_like(x1)
            for c in range(max_match_class):
                remap = remap + jnp.where(x1 == float(c), perm_f[c], 0.0)
            out = jnp.where(ordm, remap, x1)

            if keep_activation_size:
                out = out * jnp.mean(jnp.abs(xs), axis=0, keepdims=True)

            o_ref[:, off:off + strip_w] = out.astype(o_ref.dtype)

    return kernel


def categorical_activation(x, ind, cat_mask, ord_mask, perm, *,
                           num_classes=NUM_CLASSES,
                           keep_activation_size=KEEP_ACTIVATION_SIZE,
                           strip_w=512, max_tile=8192):
    S, B, H = x.shape
    ncm1 = num_classes - 1
    N = B * H
    assert S <= 255, "byte-packed boundary indices require S <= 255"

    tile_n = _choose_tile(N, strip_w, max_tile)
    n_pad = _round_up(N, tile_n)
    grid = (n_pad // tile_n,)

    x_flat = x.reshape(S, N).astype(jnp.float32)

    # Pack masks + boundary indices into a single uint32 stream:
    #   byte 0        : 0 plain / 1 categorical / 2 categorical+ordered
    #   bytes 1..nc-1 : per-position boundary sample indices (< S <= 255)
    cat_b = (cat_mask > 0.5).reshape(1, N)
    ord_b = (ord_mask > 0.5).reshape(1, N) & cat_b     # module ANDs ordered with categorical
    code = cat_b.astype(jnp.uint32) + ord_b.astype(jnp.uint32)
    ind_u = ind.reshape(ncm1, N).astype(jnp.uint32)
    byte_rows = jnp.concatenate([code, ind_u], axis=0)                   # (nb, N)
    nb = ncm1 + 1
    n_words = (nb + 3) // 4
    if n_words * 4 != nb:
        byte_rows = jnp.concatenate(
            [byte_rows, jnp.zeros((n_words * 4 - nb, N), jnp.uint32)], axis=0)
    packed = jnp.stack(
        [byte_rows[4 * w]
         | (byte_rows[4 * w + 1] << 8)
         | (byte_rows[4 * w + 2] << 16)
         | (byte_rows[4 * w + 3] << 24)
         for w in range(n_words)], axis=0)                               # (n_words, N) u32

    if n_pad != N:
        pad = n_pad - N
        x_flat = jnp.pad(x_flat, ((0, 0), (0, pad)))
        packed = jnp.pad(packed, ((0, 0), (0, pad)))

    kernel = _make_kernel(S, tile_n, strip_w, n_words, num_classes,
                          keep_activation_size)

    grid_spec = pltpu.PrefetchScalarGridSpec(
        num_scalar_prefetch=1,                          # perm -> SMEM
        grid=grid,
        in_specs=[
            pl.BlockSpec((S, tile_n),       lambda j, perm_ref: (0, j)),
            pl.BlockSpec((n_words, tile_n), lambda j, perm_ref: (0, j)),
        ],
        out_specs=pl.BlockSpec((S, tile_n), lambda j, perm_ref: (0, j)),
    )

    # TODO(synk): optionally emit bf16 output (and/or accept bf16 x, upcast in
    # kernel) for ~1.3-1.9x HBM-traffic saving if the consumer tolerates it.
    out_flat = pl.pallas_call(
        kernel,
        out_shape=jax.ShapeDtypeStruct((S, n_pad), jnp.float32),
        grid_spec=grid_spec,
        compiler_params=pltpu.CompilerParams(
            dimension_semantics=("parallel",),
            # Double-buffered footprint is ~1.5 MiB at tile_n=8192; 32 MiB is
            # safe on v5e/v6e (128 MiB VMEM) and v7x (64 MiB VMEM per core).
            vmem_limit_bytes=32 * 1024 * 1024,
        ),
    )(perm, x_flat, packed)
    return out_flat[:, :N].reshape(S, B, H)


def categorical_activation_ref(x, ind, cat_mask, ord_mask, perm, *,
                               num_classes=NUM_CLASSES,
                               keep_activation_size=KEEP_ACTIVATION_SIZE):
    """Pure-JAX reference mirroring the PyTorch forward."""
    xs = x / (1.0 + jnp.abs(x))
    bnd = jnp.take_along_axis(xs, ind, axis=0)                        # (nc-1, B, H)
    count = (xs[None] > bnd[:, None]).sum(0).astype(jnp.float32)      # (S, B, H)
    cat = cat_mask > 0.5
    ordm = (ord_mask > 0.5) & cat
    x1 = jnp.where(cat[None], count - num_classes / 2.0, xs)
    remap = jnp.zeros_like(x1)
    for c in range(num_classes):
        remap = remap + (x1 == float(c)).astype(jnp.float32) * perm[c].astype(jnp.float32)
    x2 = jnp.where(ordm[None], remap, x1)
    if keep_activation_size:
        x2 = x2 * jnp.mean(jnp.abs(xs), axis=0, keepdims=True)
    return x2


if __name__ == "__main__":
    S, B, H = 8, 4, 256          # (samples, batch, hidden) -- small test shape

    key = jax.random.PRNGKey(0)
    kx, kcat, kord, kind, kperm = jax.random.split(key, 5)

    x = jax.random.normal(kx, (S, B, H), dtype=jnp.float32)

    # categorical / ordered masks (float 0/1); wrapper and ref both AND
    # ordered with categorical exactly as the PyTorch module does.
    cat_mask = (jax.random.uniform(kcat, (B, H)) < CATEGORICAL_P).astype(jnp.float32)
    ord_mask = (jax.random.uniform(kord, (B, H)) < ORDERED_P).astype(jnp.float32)

    # per-(b,h) boundary sample indices: torch.randint(0, S, (num_classes-1,))
    ind = jax.random.randint(kind, (NUM_CLASSES - 1, B, H), 0, S, dtype=jnp.int32)

    # random class permutation for randomize_classes
    perm = jax.random.permutation(kperm, NUM_CLASSES).astype(jnp.int32)

    out = categorical_activation(x, ind, cat_mask, ord_mask, perm)
    out = jax.block_until_ready(out)

    ref = categorical_activation_ref(x, ind, cat_mask, ord_mask, perm)
    np.testing.assert_allclose(np.asarray(out), np.asarray(ref), rtol=1e-6, atol=1e-6)

    print("KERNEL_OK")
</pallas_src>

<mosaic_0001>
module attributes {stable_mosaic.version = 11 : i64} {
  func.func @kernel(%arg0: i32, %arg1: memref<4xi32, #tpu.memory_space<smem>>, %arg2: memref<8x512xf32, #tpu.memory_space<vmem>>, %arg3: memref<1x512xi32, #tpu.memory_space<vmem>>, %arg4: memref<8x512xf32, #tpu.memory_space<vmem>>) attributes {dimension_semantics = [#tpu.dimension_semantics<parallel>], iteration_bounds = array<i64: 2>, scalar_prefetch = 1 : i64, scratch_operands = 0 : i64, tpu.core_type = #tpu.core_type<tc>, window_params = [{transform_indices = @transform_0, window_bounds = array<i64: 8, 512>}, {transform_indices = @transform_1, window_bounds = array<i64: 1, 512>}, {transform_indices = @transform_2, window_bounds = array<i64: 8, 512>}]} {
    %c0 = arith.constant 0 : index
    %0 = memref.load %arg1[%c0] : memref<4xi32, #tpu.memory_space<smem>>
    %1 = arith.sitofp %0 : i32 to f32
    %c1 = arith.constant 1 : index
    %2 = memref.load %arg1[%c1] : memref<4xi32, #tpu.memory_space<smem>>
    %3 = arith.sitofp %2 : i32 to f32
    %4 = tpu.iota {dimensions = array<i32: 0>} : vector<8x512xi32>
    %c0_0 = arith.constant 0 : index
    %c0_1 = arith.constant 0 : index
    %5 = vector.load %arg2[%c0_0, %c0_1] : memref<8x512xf32, #tpu.memory_space<vmem>>, vector<8x512xf32>
    %6 = math.absf %5 : vector<8x512xf32>
    %cst = arith.constant 1.000000e+00 : f32
    %7 = vector.broadcast %cst : f32 to vector<8x512xf32>
    %8 = arith.addf %7, %6 : vector<8x512xf32>
    %9 = arith.divf %5, %8 : vector<8x512xf32>
    %c0_2 = arith.constant 0 : index
    %c0_3 = arith.constant 0 : index
    %10 = vector.load %arg3[%c0_2, %c0_3] : memref<1x512xi32, #tpu.memory_space<vmem>>, vector<1x512xi32>
    %c0_i32 = arith.constant 0 : i32
    %11 = vector.broadcast %c0_i32 : i32 to vector<1x512xi32>
    %12 = arith.shrui %10, %11 : vector<1x512xi32>
    %c255_i32 = arith.constant 255 : i32
    %13 = vector.broadcast %c255_i32 : i32 to vector<1x512xi32>
    %14 = arith.andi %12, %13 : vector<1x512xi32>
    %c0_i32_4 = arith.constant 0 : i32
    %15 = vector.broadcast %c0_i32_4 : i32 to vector<1x512xi32>
    %16 = arith.cmpi sgt, %14, %15 : vector<1x512xi32>
    %c1_i32 = arith.constant 1 : i32
    %17 = vector.broadcast %c1_i32 : i32 to vector<1x512xi32>
    %18 = arith.cmpi sgt, %14, %17 : vector<1x512xi32>
    %c0_i32_5 = arith.constant 0 : i32
    %19 = vector.broadcast %c0_i32_5 : i32 to vector<8x512xi32>
    %c8_i32 = arith.constant 8 : i32
    %20 = vector.broadcast %c8_i32 : i32 to vector<1x512xi32>
    %21 = arith.shrui %10, %20 : vector<1x512xi32>
    %c255_i32_6 = arith.constant 255 : i32
    %22 = vector.broadcast %c255_i32_6 : i32 to vector<1x512xi32>
    %23 = arith.andi %21, %22 : vector<1x512xi32>
    %24 = vector.broadcast %23 : vector<1x512xi32> to vector<8x512xi32>
    %25 = arith.cmpi eq, %24, %4 : vector<8x512xi32>
    %cst_7 = arith.constant 0.000000e+00 : f32
    %26 = vector.broadcast %cst_7 : f32 to vector<8x512xf32>
    %27 = arith.select %25, %9, %26 : vector<8x512xi1>, vector<8x512xf32>
    %cst_8 = arith.constant dense<0.000000e+00> : vector<512xf32>
    %28 = vector.multi_reduction <add>, %27, %cst_8 [0] : vector<8x512xf32> to vector<512xf32>
    %29 = vector.shape_cast %28 : vector<512xf32> to vector<1x512xf32>
    %30 = vector.broadcast %29 : vector<1x512xf32> to vector<8x512xf32>
    %31 = arith.cmpf ogt, %9, %30 : vector<8x512xf32>
    %32 = arith.extui %31 : vector<8x512xi1> to vector<8x512xi32>
    %33 = arith.addi %19, %32 : vector<8x512xi32>
    %c16_i32 = arith.constant 16 : i32
    %34 = vector.broadcast %c16_i32 : i32 to vector<1x512xi32>
    %35 = arith.shrui %10, %34 : vector<1x512xi32>
    %c255_i32_9 = arith.constant 255 : i32
    %36 = vector.broadcast %c255_i32_9 : i32 to vector<1x512xi32>
    %37 = arith.andi %35, %36 : vector<1x512xi32>
    %38 = vector.broadcast %37 : vector<1x512xi32> to vector<8x512xi32>
    %39 = arith.cmpi eq, %38, %4 : vector<8x512xi32>
    %cst_10 = arith.constant 0.000000e+00 : f32
    %40 = vector.broadcast %cst_10 : f32 to vector<8x512xf32>
    %41 = arith.select %39, %9, %40 : vector<8x512xi1>, vector<8x512xf32>
    %cst_11 = arith.constant dense<0.000000e+00> : vector<512xf32>
    %42 = vector.multi_reduction <add>, %41, %cst_11 [0] : vector<8x512xf32> to vector<512xf32>
    %43 = vector.shape_cast %42 : vector<512xf32> to vector<1x512xf32>
    %44 = vector.broadcast %43 : vector<1x512xf32> to vector<8x512xf32>
    %45 = arith.cmpf ogt, %9, %44 : vector<8x512xf32>
    %46 = arith.extui %45 : vector<8x512xi1> to vector<8x512xi32>
    %47 = arith.addi %33, %46 : vector<8x512xi32>
    %c24_i32 = arith.constant 24 : i32
    %48 = vector.broadcast %c24_i32 : i32 to vector<1x512xi32>
    %49 = arith.shrui %10, %48 : vector<1x512xi32>
    %c255_i32_12 = arith.constant 255 : i32
    %50 = vector.broadcast %c255_i32_12 : i32 to vector<1x512xi32>
    %51 = arith.andi %49, %50 : vector<1x512xi32>
    %52 = vector.broadcast %51 : vector<1x512xi32> to vector<8x512xi32>
    %53 = arith.cmpi eq, %52, %4 : vector<8x512xi32>
    %cst_13 = arith.constant 0.000000e+00 : f32
    %54 = vector.broadcast %cst_13 : f32 to vector<8x512xf32>
    %55 = arith.select %53, %9, %54 : vector<8x512xi1>, vector<8x512xf32>
    %cst_14 = arith.constant dense<0.000000e+00> : vector<512xf32>
    %56 = vector.multi_reduction <add>, %55, %cst_14 [0] : vector<8x512xf32> to vector<512xf32>
    %57 = vector.shape_cast %56 : vector<512xf32> to vector<1x512xf32>
    %58 = vector.broadcast %57 : vector<1x512xf32> to vector<8x512xf32>
    %59 = arith.cmpf ogt, %9, %58 : vector<8x512xf32>
    %60 = arith.extui %59 : vector<8x512xi1> to vector<8x512xi32>
    %61 = arith.addi %47, %60 : vector<8x512xi32>
    %62 = arith.sitofp %61 : vector<8x512xi32> to vector<8x512xf32>
    %cst_15 = arith.constant 2.000000e+00 : f32
    %63 = vector.broadcast %cst_15 : f32 to vector<8x512xf32>
    %64 = arith.subf %62, %63 : vector<8x512xf32>
    %65 = vector.shape_cast %16 : vector<1x512xi1> to vector<1x512xi1>
    %66 = vector.broadcast %65 : vector<1x512xi1> to vector<8x512xi1>
    %67 = arith.select %66, %64, %9 : vector<8x512xi1>, vector<8x512xf32>
    %cst_16 = arith.constant 0.000000e+00 : f32
    %68 = vector.broadcast %cst_16 : f32 to vector<8x512xf32>
    %cst_17 = arith.constant 0.000000e+00 : f32
    %69 = vector.broadcast %cst_17 : f32 to vector<8x512xf32>
    %70 = arith.cmpf oeq, %67, %69 : vector<8x512xf32>
    %cst_18 = arith.constant 0.000000e+00 : f32
    %71 = vector.broadcast %1 : f32 to vector<8x512xf32>
    %72 = vector.broadcast %cst_18 : f32 to vector<8x512xf32>
    %73 = arith.select %70, %71, %72 : vector<8x512xi1>, vector<8x512xf32>
    %74 = arith.addf %68, %73 : vector<8x512xf32>
    %cst_19 = arith.constant 1.000000e+00 : f32
    %75 = vector.broadcast %cst_19 : f32 to vector<8x512xf32>
    %76 = arith.cmpf oeq, %67, %75 : vector<8x512xf32>
    %cst_20 = arith.constant 0.000000e+00 : f32
    %77 = vector.broadcast %3 : f32 to vector<8x512xf32>
    %78 = vector.broadcast %cst_20 : f32 to vector<8x512xf32>
    %79 = arith.select %76, %77, %78 : vector<8x512xi1>, vector<8x512xf32>
    %80 = arith.addf %74, %79 : vector<8x512xf32>
    %81 = vector.shape_cast %18 : vector<1x512xi1> to vector<1x512xi1>
    %82 = vector.broadcast %81 : vector<1x512xi1> to vector<8x512xi1>
    %83 = arith.select %82, %80, %67 : vector<8x512xi1>, vector<8x512xf32>
    %c0_21 = arith.constant 0 : index
    %c0_22 = arith.constant 0 : index
    %84 = vector.load %arg4[%c0_21, %c0_22] : memref<8x512xf32, #tpu.memory_space<vmem>>, vector<8x512xf32>
    tpu.vector_store %arg4[%c0_21, %c0_22], %83 {strides = array<i32>} : memref<8x512xf32, #tpu.memory_space<vmem>>, vector<8x512xf32>,
    return
  }
  func.func @transform_0(%arg0: i32, %arg1: memref<4xi32, #tpu.memory_space<smem>>) -> (i32, i32) {
    %c0_i32 = arith.constant 0 : i32
    %c0_i32_0 = arith.constant 0 : i32
    return %c0_i32, %arg0 : i32, i32
  }
  func.func @transform_1(%arg0: i32, %arg1: memref<4xi32, #tpu.memory_space<smem>>) -> (i32, i32) {
    %c0_i32 = arith.constant 0 : i32
    %c0_i32_0 = arith.constant 0 : i32
    return %c0_i32, %arg0 : i32, i32
  }
  func.func @transform_2(%arg0: i32, %arg1: memref<4xi32, #tpu.memory_space<smem>>) -> (i32, i32) {
    %c0_i32 = arith.constant 0 : i32
    %c0_i32_0 = arith.constant 0 : i32
    return %c0_i32, %arg0 : i32, i32
  }
}

</mosaic_0001>

<llo_original>
// kernel: tpu_custom_call.1
$region0: #{tpu_custom_call.1}
  #allocation0 [shape = 'u32[]', space=smem, size = 0x4, offset = 0x4, fixed_abs, tag = 'smem constant byte address 0x4 - core index']
  #allocation1 [shape = 'u32[72,128]{1,0:T(1,128)}', space=vmem, size = 0x9000, scoped, tag = 'internal scratch']
  #allocation2 [shape = 's32[1]{0}', space=sflag, size = 0x4, scoped, tag = 'scoped memory for tpu_custom_call.1']
  #allocation3 [shape = 'u8[512]{0}', space=smem, size = 0x200, scoped, tag = 'prefetched SMEM operand 0']
  %s0 = inlined_call_operand.hbm [shape: s32[4], index: 0, kind: input, shape index: {}]
  %s1 = inlined_call_operand.hbm [shape: f32[8,1024], index: 1, kind: input, shape index: {}]
  %s2 = inlined_call_operand.hbm [shape: u32[1,1024], index: 2, kind: input, shape index: {}]
  %s3 = inlined_call_operand.hbm [shape: f32[8,1024], index: 3, kind: output, shape index: {}]
  %s4 = sld [smem:[#allocation0]]
  $region49: #{tpu_custom_call.1} parent=0
    _
  %s6 = ssub.s32 1, %s4
  %s7 = scalar_select 0, %s6, %s4
  %s9 = sshll.u32 %s0, 4
  %s10 = int_to_ptr.hbm [resolvable:$true] %s9
  %12 = dma.hbm_to_smem %s10, 16, [#allocation3], [#allocation2]
  %14 = dma.done [#allocation2], 16
  %15 = sfence
  $region1: #{tpu_custom_call.1} parent=0
    #allocation4 [shape = 'u8[32768]{0}', space=vmem, size = 0x8000, scoped, tag = 'input window, operand 1']
    #allocation5 [shape = 's32[2]{0}', space=sflag, size = 0x8, scoped, tag = 'scoped memory for tpu_custom_call.1']
    #allocation6 [shape = 's32[2]{0}', space=sflag, size = 0x8, scoped, tag = 'scoped memory for tpu_custom_call.1']
    #allocation7 [shape = 'u8[4096]{0}', space=vmem, size = 0x1000, scoped, tag = 'input window, operand 2']
    #allocation8 [shape = 's32[2]{0}', space=sflag, size = 0x8, scoped, tag = 'scoped memory for tpu_custom_call.1']
    #allocation9 [shape = 'u8[32768]{0}', space=vmem, size = 0x8000, scoped, tag = 'output window, operand 0']
    %16 = vsyncpa [#allocation5], 0
    %s17 = scalar_lea.sflag [#allocation5], 1
    %18 = vsyncpa %s17, 0
    %19 = vsyncpa [#allocation8], 0
    %s20 = scalar_lea.sflag [#allocation8], 1
    %21 = vsyncpa %s20, 0
    %22 = vsyncpa [#allocation6], 0
    %s23 = scalar_lea.sflag [#allocation6], 1
    %24 = vsyncpa %s23, 0
    loop: start=0, step=1, limit=4
    $region2: #{tpu_custom_call.1} parent=1 // loop_pre_header
      _
    $region3: #{tpu_custom_call.1} parent=1 // loop_header
      %s26 = sphi 0, %s30
      %p27 = scmp.ge.s32.totalorder %s26, 4
      %s36 = sphi 0, %s38
      %s39 = sphi 0, %s36
      %s40 = sphi 0, %s39
      %s56 = sphi 0, %s40
      %s62 = sphi 0, %s64
      %s65 = sphi 0, %s62
      %s66 = sphi 0, %s65
      %s82 = sphi 0, %s66
      %s88 = sphi 0, %s90
      %s91 = sphi 0, %s88
      %s92 = sphi 0, %s91
      %s108 = sphi 0, %s92
    $region4: #{tpu_custom_call.1} parent=1 // loop_header_branch
      %29 = sbr.rel (%p27) target = $region8
    $region5: #{tpu_custom_call.1} parent=1 // loop_body
      %s31 = ssub.s32 %s26, 1
      %s32 = ssub.s32 %s26, 2
      %s33 = sadd.s32 %s26, 1
      %s34 = ssub.s32 %s26, %s33
      %p35 = scmp.eq.s32.totalorder %s34, 0
      %s37 = sadd.s32 %s36, 1
      %s38 = scalar_select %p35, %s36, %s37
      %p41 = pneg %p35
      %p42 = scmp.eq.s32.totalorder %s26, 1
      %p43 = por %p41, %p42
      %p44 = scmp.ne.s32.totalorder %s36, %s39
      %p45 = scmp.eq.s32.totalorder %s26, 0
      %p46 = por %p44, %p45
      %p47 = scmp.ne.s32.totalorder %s36, %s39
      %p48 = scmp.eq.s32.totalorder %s31, 1
      %p49 = por %p47, %p48
      %p50 = scmp.ne.s32.totalorder %s39, %s40
      %p51 = scmp.eq.s32.totalorder %s31, 0
      %p52 = por %p50, %p51
      %p53 = scmp.ne.s32.totalorder %s39, %s40
      %p54 = scmp.eq.s32.totalorder %s32, 1
      %p55 = por %p53, %p54
      %p57 = scmp.ne.s32.totalorder %s40, %s56
      %p58 = scmp.eq.s32.totalorder %s32, 0
      %p59 = por %p57, %p58
      %s60 = ssub.s32 %s26, %s33
      %p61 = scmp.eq.s32.totalorder %s60, 0
      %s63 = sadd.s32 %s62, 1
      %s64 = scalar_select %p61, %s62, %s63
      %p67 = pneg %p61
      %p68 = scmp.eq.s32.totalorder %s26, 1
      %p69 = por %p67, %p68
      %p70 = scmp.ne.s32.totalorder %s62, %s65
      %p71 = scmp.eq.s32.totalorder %s26, 0
      %p72 = por %p70, %p71
      %p73 = scmp.ne.s32.totalorder %s62, %s65
      %p74 = scmp.eq.s32.totalorder %s31, 1
      %p75 = por %p73, %p74
      %p76 = scmp.ne.s32.totalorder %s65, %s66
      %p77 = scmp.eq.s32.totalorder %s31, 0
      %p78 = por %p76, %p77
      %p79 = scmp.ne.s32.totalorder %s65, %s66
      %p80 = scmp.eq.s32.totalorder %s32, 1
      %p81 = por %p79, %p80
      %p83 = scmp.ne.s32.totalorder %s66, %s82
      %p84 = scmp.eq.s32.totalorder %s32, 0
      %p85 = por %p83, %p84
      %s86 = ssub.s32 %s26, %s33
      %p87 = scmp.eq.s32.totalorder %s86, 0
      %s89 = sadd.s32 %s88, 1
      %s90 = scalar_select %p87, %s88, %s89
      %p93 = pneg %p87
      %p94 = scmp.eq.s32.totalorder %s26, 1
      %p95 = por %p93, %p94
      %p96 = scmp.ne.s32.totalorder %s88, %s91
      %p97 = scmp.eq.s32.totalorder %s26, 0
      %p98 = por %p96, %p97
      %p99 = scmp.ne.s32.totalorder %s88, %s91
      %p100 = scmp.eq.s32.totalorder %s31, 1
      %p101 = por %p99, %p100
      %p102 = scmp.ne.s32.totalorder %s91, %s92
      %p103 = scmp.eq.s32.totalorder %s31, 0
      %p104 = por %p102, %p103
      %p105 = scmp.ne.s32.totalorder %s91, %s92
      %p106 = scmp.eq.s32.totalorder %s32, 1
      %p107 = por %p105, %p106
      %p109 = scmp.ne.s32.totalorder %s92, %s108
      %p110 = scmp.eq.s32.totalorder %s32, 0
      %p111 = por %p109, %p110
      %p112 = scmp.le.s32.totalorder 1, %s26
      %p113 = scmp.lt.s32.totalorder %s26, 3
      %p114 = pnand %p112, %p113
      %p115 = pneg %p114
      // Predicated region
      $region9: #{tpu_custom_call.1} parent=5 // pred_check
        _
      $region10: #{tpu_custom_call.1} parent=5 // pred_check_branch
        %117 = sbr.rel (%p114) target = $region12
      $region11: #{tpu_custom_call.1} parent=5 // pred_region
        %s118 = ssub.s32 %s26, 1
      $region12: #{tpu_custom_call.1} parent=5 // pred_fallthru
        _
      %p119 = scmp.lt.s32.totalorder %s26, 2
      // Predicated region
      $region13: #{tpu_custom_call.1} parent=5 // pred_check
        %p120 = pneg %p119
      $region14: #{tpu_custom_call.1} parent=5 // pred_check_branch
        %122 = sbr.rel (%p120) target = $region16
      $region15: #{tpu_custom_call.1} parent=5 // pred_region
        // Predicated region
        $region17: #{tpu_custom_call.1} parent=15 // pred_check
          %p123 = pneg %p46
        $region18: #{tpu_custom_call.1} parent=15 // pred_check_branch
          %125 = sbr.rel (%p123) target = $region20
        $region19: #{tpu_custom_call.1} parent=15 // pred_region
          %s126 = sand.u32 %s36, 1
          %s127 = scalar_lea.sflag [#allocation5], %s126
          %s128 = sand.u32 %s36, 1
          %s129 = smul.addr %s128, 32
          %s130 = scalar_lea.vmem [#allocation4], %s129
          %s131 = smul.u32 4, %s26
          %133 = vsyncadd %s127, 0
          %s134 = smul.addr %s131, 8
          %s135 = scalar_lea.hbm %s1, %s134
          %s137 = sshll.u32 %s135, 4
          %s138 = int_to_ptr.hbm [resolvable:$true] %s137
          %s139 = sshll.u32 %s130, 4
          %s140 = int_to_ptr.vmem [resolvable:$true] %s139
          %142 = dma.hbm_to_vmem [thread:$0]  %s138, 512, %s140, %s127
        $region20: #{tpu_custom_call.1} parent=15 // pred_fallthru
          _
        // Predicated region
        $region21: #{tpu_custom_call.1} parent=15 // pred_check
          %p143 = pneg %p72
        $region22: #{tpu_custom_call.1} parent=15 // pred_check_branch
          %145 = sbr.rel (%p143) target = $region24
        $region23: #{tpu_custom_call.1} parent=15 // pred_region
          %s146 = sand.u32 %s62, 1
          %s147 = scalar_lea.sflag [#allocation8], %s146
          %s148 = sand.u32 %s62, 1
          %s149 = smul.addr %s148, 4
          %s150 = scalar_lea.vmem [#allocation7], %s149
          %s151 = smul.u32 4, %s26
          %153 = vsyncadd %s147, 0
          %s154 = scalar_lea.hbm %s2, %s151
          %s156 = sshll.u32 %s154, 4
          %s157 = int_to_ptr.hbm [resolvable:$true] %s156
          %s158 = sshll.u32 %s150, 4
          %s159 = int_to_ptr.vmem [resolvable:$true] %s158
          %161 = dma.hbm_to_vmem [thread:$0]  %s157, 64, %s159, %s147
        $region24: #{tpu_custom_call.1} parent=15 // pred_fallthru
          _
      $region16: #{tpu_custom_call.1} parent=5 // pred_fallthru
        _
      %p162 = scmp.le.s32.totalorder 1, %s26
      %p163 = scmp.lt.s32.totalorder %s26, 3
      %p164 = pnand %p162, %p163
      %p165 = pneg %p164
      // Predicated region
      $region25: #{tpu_custom_call.1} parent=5 // pred_check
        _
      $region26: #{tpu_custom_call.1} parent=5 // pred_check_branch
        %167 = sbr.rel (%p164) target = $region28
      $region27: #{tpu_custom_call.1} parent=5 // pred_region
        %s168 = ssub.s32 %s26, 1
        %s169 = sand.u32 %s39, 1
        %s170 = scalar_lea.sflag [#allocation5], %s169
        %s171 = sand.u32 %s39, 1
        %s172 = smul.addr %s171, 32
        %s173 = scalar_lea.vmem [#allocation4], %s172
        // Predicated region
        $region29: #{tpu_custom_call.1} parent=27 // pred_check
          %p174 = pneg %p52
        $region30: #{tpu_custom_call.1} parent=27 // pred_check_branch
          %176 = sbr.rel (%p174) target = $region32
        $region31: #{tpu_custom_call.1} parent=27 // pred_region
          %178 = dma.done %s170, 512
        $region32: #{tpu_custom_call.1} parent=27 // pred_fallthru
          _
        %s179 = sand.u32 %s65, 1
        %s180 = scalar_lea.sflag [#allocation8], %s179
        %s181 = sand.u32 %s65, 1
        %s182 = smul.addr %s181, 4
        %s183 = scalar_lea.vmem [#allocation7], %s182
        // Predicated region
        $region33: #{tpu_custom_call.1} parent=27 // pred_check
          %p184 = pneg %p78
        $region34: #{tpu_custom_call.1} parent=27 // pred_check_branch
          %186 = sbr.rel (%p184) target = $region36
        $region35: #{tpu_custom_call.1} parent=27 // pred_region
          %188 = dma.done %s180, 64
        $region36: #{tpu_custom_call.1} parent=27 // pred_fallthru
          _
        %s189 = sand.u32 %s39, 1
        %s190 = scalar_lea.sflag [#allocation5], %s189
        %s191 = sand.u32 %s39, 1
        %s192 = smul.addr %s191, 32
        %s193 = scalar_lea.vmem [#allocation4], %s192
        %p194 = pneg %p52
        %p195 = pneg %p49
        %s196 = sand.u32 %s65, 1
        %s197 = scalar_lea.sflag [#allocation8], %s196
        %s198 = sand.u32 %s65, 1
        %s199 = smul.addr %s198, 4
        %s200 = scalar_lea.vmem [#allocation7], %s199
        %p201 = pneg %p78
        %p202 = pneg %p75
        %p203 = pneg %p104
        %p204 = pneg %p101
        %s205 = sand.u32 %s91, 1
        %s206 = scalar_lea.sflag [#allocation6], %s205
        %s207 = sand.u32 %s91, 1
        %s208 = smul.addr %s207, 32
        %s209 = scalar_lea.vmem [#allocation9], %s208
        %s210 = smul.u32 4, %s31
        %s211 = smul.u32 4, %s31
        %s212 = smul.u32 4, %s31
        %s213 = sld [smem:[#allocation3]]
        %s214 = scvt.s32.f32 %s213
        %s215 = sld [smem:[#allocation3 + $0x1]]
        %s216 = scvt.s32.f32 %s215
        %v217 = vlaneseq
        %v218 = vshrl.u32 %v217, 7
        %v219 = vld [vmem:[%s173] sm:$0xff]
        %v220 = vld [vmem:[%s173 + $0x8] sm:$0xff]
        %v221 = vld [vmem:[%s173 + $0x10] sm:$0xff]
        %v222 = vld [vmem:[%s173 + $0x18] sm:$0xff]
        %v223 = vand.u32 2147483647, %v219
        %v224 = vand.u32 2147483647, %v220
        %v225 = vand.u32 2147483647, %v221
        %v226 = vand.u32 2147483647, %v222
        %v227 = vadd.f32 %v223, 1.0
        %v228 = vadd.f32 %v224, 1.0
        %v229 = vadd.f32 %v225, 1.0
        %v230 = vadd.f32 %v226, 1.0
        %v231 = vrcp.pop %v227
        %v232 = vmul.f32 %v227, %v231
        %v233 = vsub.f32 1.0, %v232
        %v234 = vmul.f32 %v231, %v233
        %v235 = vadd.f32 %v231, %v234
        %vm236 = vweird.f32 %v227
        %vm237 = vweird.f32 %v231
        %vm238 = vmor %vm236, %vm237
        %v239 = vsel %vm238, %v231, %v235
        %v240 = vand.u32 2147483647, %v227
        %vm241 = vcmp.eq.f32.partialorder %v240, 8.507059e+37
        %v242 = vand.u32 %v227, 2147483648
        %v243 = vor.u32 1.1754944e-38, %v242
        %v244 = vsel %vm241, %v243, %v239
        %v245 = vmul.f32 %v219, %v244
        %v246 = vrcp.pop %v228
        %v247 = vmul.f32 %v228, %v246
        %v248 = vsub.f32 1.0, %v247
        %v249 = vmul.f32 %v246, %v248
        %v250 = vadd.f32 %v246, %v249
        %vm251 = vweird.f32 %v228
        %vm252 = vweird.f32 %v246
        %vm253 = vmor %vm251, %vm252
        %v254 = vsel %vm253, %v246, %v250
        %v255 = vand.u32 2147483647, %v228
        %vm256 = vcmp.eq.f32.partialorder %v255, 8.507059e+37
        %v257 = vand.u32 %v228, 2147483648
        %v258 = vor.u32 1.1754944e-38, %v257
        %v259 = vsel %vm256, %v258, %v254
        %v260 = vmul.f32 %v220, %v259
        %v261 = vrcp.pop %v229
        %v262 = vmul.f32 %v229, %v261
        %v263 = vsub.f32 1.0, %v262
        %v264 = vmul.f32 %v261, %v263
        %v265 = vadd.f32 %v261, %v264
        %vm266 = vweird.f32 %v229
        %vm267 = vweird.f32 %v261
        %vm268 = vmor %vm266, %vm267
        %v269 = vsel %vm268, %v261, %v265
        %v270 = vand.u32 2147483647, %v229
        %vm271 = vcmp.eq.f32.partialorder %v270, 8.507059e+37
        %v272 = vand.u32 %v229, 2147483648
        %v273 = vor.u32 1.1754944e-38, %v272
        %v274 = vsel %vm271, %v273, %v269
        %v275 = vmul.f32 %v221, %v274
        %v276 = vrcp.pop %v230
        %v277 = vmul.f32 %v230, %v276
        %v278 = vsub.f32 1.0, %v277
        %v279 = vmul.f32 %v276, %v278
        %v280 = vadd.f32 %v276, %v279
        %vm281 = vweird.f32 %v230
        %vm282 = vweird.f32 %v276
        %vm283 = vmor %vm281, %vm282
        %v284 = vsel %vm283, %v276, %v280
        %v285 = vand.u32 2147483647, %v230
        %vm286 = vcmp.eq.f32.partialorder %v285, 8.507059e+37
        %v287 = vand.u32 %v230, 2147483648
        %v288 = vor.u32 1.1754944e-38, %v287
        %v289 = vsel %vm286, %v288, %v284
        %v290 = vmul.f32 %v222, %v289
        %v291 = vld [vmem:[%s183] sm:$0xf]
        %v292 = vand.u32 %v291, 255
        %vm293 = vcmp.gt.s32.totalorder %v292, 0
        %vm294 = vcmp.gt.s32.totalorder %v292, 1
        %v295 = vshrl.u32 %v291, 8
        %v296 = vand.u32 %v295, 255
        %v297 = vperm.slane %v296, 0
        %v298 = vperm.slane %v296, 1
        %v299 = vperm.slane %v296, 2
        %v300 = vperm.slane %v296, 3
        %vm301 = vcmp.eq.s32.totalorder %v297, %v218
        %vm302 = vcmp.eq.s32.totalorder %v298, %v218
        %vm303 = vcmp.eq.s32.totalorder %v299, %v218
        %vm304 = vcmp.eq.s32.totalorder %v300, %v218
        %v305 = vsel %vm301, %v245, 0.0
        %v306 = vsel %vm302, %v260, 0.0
        %v307 = vsel %vm303, %v275, 0.0
        %v308 = vsel %vm304, %v290, 0.0
        %v309 = vrot.slane %v305, 4
        %v310 = vadd.f32 %v305, %v309
        %v311 = vrot.slane %v310, 2
        %v312 = vadd.f32 %v310, %v311
        %v313 = vrot.slane %v312, 1
        %v314 = vadd.f32 %v312, %v313
        %v315 = vrot.slane %v306, 4
        %v316 = vadd.f32 %v306, %v315
        %v317 = vrot.slane %v316, 2
        %v318 = vadd.f32 %v316, %v317
        %v319 = vrot.slane %v318, 1
        %v320 = vadd.f32 %v318, %v319
        %v321 = vrot.slane %v307, 4
        %v322 = vadd.f32 %v307, %v321
        %v323 = vrot.slane %v322, 2
        %v324 = vadd.f32 %v322, %v323
        %v325 = vrot.slane %v324, 1
        %v326 = vadd.f32 %v324, %v325
        %v327 = vrot.slane %v308, 4
        %v328 = vadd.f32 %v308, %v327
        %v329 = vrot.slane %v328, 2
        %v330 = vadd.f32 %v328, %v329
        %v331 = vrot.slane %v330, 1
        %v332 = vadd.f32 %v330, %v331
        %vm333 = vcmp.gt.f32.partialorder %v245, %v314
        %vm334 = vcmp.gt.f32.partialorder %v260, %v320
        %vm335 = vcmp.gt.f32.partialorder %v275, %v326
        %vm336 = vcmp.gt.f32.partialorder %v290, %v332
        %v337 = vsel %vm333, 1, 0
        %v338 = vsel %vm334, 1, 0
        %v339 = vsel %vm335, 1, 0
        %v340 = vsel %vm336, 1, 0
        %v341 = vshrl.u32 %v291, 16
        %v342 = vand.u32 %v341, 255
        %v343 = vperm.slane %v342, 0
        %v344 = vperm.slane %v342, 1
        %v345 = vperm.slane %v342, 2
        %v346 = vperm.slane %v342, 3
        %vm347 = vcmp.eq.s32.totalorder %v343, %v218
        %vm348 = vcmp.eq.s32.totalorder %v344, %v218
        %vm349 = vcmp.eq.s32.totalorder %v345, %v218
        %vm350 = vcmp.eq.s32.totalorder %v346, %v218
        %v351 = vsel %vm347, %v245, 0.0
        %v352 = vsel %vm348, %v260, 0.0
        %v353 = vsel %vm349, %v275, 0.0
        %v354 = vsel %vm350, %v290, 0.0
        %v355 = vrot.slane %v351, 4
        %v356 = vadd.f32 %v351, %v355
        %v357 = vrot.slane %v356, 2
        %v358 = vadd.f32 %v356, %v357
        %v359 = vrot.slane %v358, 1
        %v360 = vadd.f32 %v358, %v359
        %v361 = vrot.slane %v352, 4
        %v362 = vadd.f32 %v352, %v361
        %v363 = vrot.slane %v362, 2
        %v364 = vadd.f32 %v362, %v363
        %v365 = vrot.slane %v364, 1
        %v366 = vadd.f32 %v364, %v365
        %v367 = vrot.slane %v353, 4
        %v368 = vadd.f32 %v353, %v367
        %v369 = vrot.slane %v368, 2
        %v370 = vadd.f32 %v368, %v369
        %v371 = vrot.slane %v370, 1
        %v372 = vadd.f32 %v370, %v371
        %v373 = vrot.slane %v354, 4
        %v374 = vadd.f32 %v354, %v373
        %v375 = vrot.slane %v374, 2
        %v376 = vadd.f32 %v374, %v375
        %v377 = vrot.slane %v376, 1
        %v378 = vadd.f32 %v376, %v377
        %vm379 = vcmp.gt.f32.partialorder %v245, %v360
        %vm380 = vcmp.gt.f32.partialorder %v260, %v366
        %vm381 = vcmp.gt.f32.partialorder %v275, %v372
        %vm382 = vcmp.gt.f32.partialorder %v290, %v378
        %v383 = vsel %vm379, 1, 0
        %v384 = vsel %vm380, 1, 0
        %v385 = vsel %vm381, 1, 0
        %v386 = vsel %vm382, 1, 0
        %v387 = vadd.s32 %v337, %v383
        %v388 = vadd.s32 %v338, %v384
        %v389 = vadd.s32 %v339, %v385
        %v390 = vadd.s32 %v340, %v386
        %v391 = vshrl.u32 %v291, 24
        %v392 = vand.u32 %v391, 255
        %v393 = vperm.slane %v392, 0
        %v394 = vperm.slane %v392, 1
        %v395 = vperm.slane %v392, 2
        %v396 = vperm.slane %v392, 3
        %vm397 = vcmp.eq.s32.totalorder %v393, %v218
        %vm398 = vcmp.eq.s32.totalorder %v394, %v218
        %vm399 = vcmp.eq.s32.totalorder %v395, %v218
        %vm400 = vcmp.eq.s32.totalorder %v396, %v218
        %v401 = vsel %vm397, %v245, 0.0
        %v402 = vsel %vm398, %v260, 0.0
        %v403 = vsel %vm399, %v275, 0.0
        %v404 = vsel %vm400, %v290, 0.0
        %v405 = vrot.slane %v401, 4
        %v406 = vadd.f32 %v401, %v405
        %v407 = vrot.slane %v406, 2
        %v408 = vadd.f32 %v406, %v407
        %v409 = vrot.slane %v408, 1
        %v410 = vadd.f32 %v408, %v409
        %v411 = vrot.slane %v402, 4
        %v412 = vadd.f32 %v402, %v411
        %v413 = vrot.slane %v412, 2
        %v414 = vadd.f32 %v412, %v413
        %v415 = vrot.slane %v414, 1
        %v416 = vadd.f32 %v414, %v415
        %v417 = vrot.slane %v403, 4
        %v418 = vadd.f32 %v403, %v417
        %v419 = vrot.slane %v418, 2
        %v420 = vadd.f32 %v418, %v419
        %v421 = vrot.slane %v420, 1
        %v422 = vadd.f32 %v420, %v421
        %v423 = vrot.slane %v404, 4
        %v424 = vadd.f32 %v404, %v423
        %v425 = vrot.slane %v424, 2
        %v426 = vadd.f32 %v424, %v425
        %v427 = vrot.slane %v426, 1
        %v428 = vadd.f32 %v426, %v427
        %vm429 = vcmp.gt.f32.partialorder %v245, %v410
        %vm430 = vcmp.gt.f32.partialorder %v260, %v416
        %vm431 = vcmp.gt.f32.partialorder %v275, %v422
        %vm432 = vcmp.gt.f32.partialorder %v290, %v428
        %v433 = vsel %vm429, 1, 0
        %v434 = vsel %vm430, 1, 0
        %v435 = vsel %vm431, 1, 0
        %v436 = vsel %vm432, 1, 0
        %v437 = vadd.s32 %v387, %v433
        %v438 = vadd.s32 %v388, %v434
        %v439 = vadd.s32 %v389, %v435
        %v440 = vadd.s32 %v390, %v436
        %v441 = vcvt.s32.f32 %v437
        %v442 = vcvt.s32.f32 %v438
        %v443 = vcvt.s32.f32 %v439
        %v444 = vcvt.s32.f32 %v440
        %v445 = vsub.f32 %v441, 2.0
        %v446 = vsub.f32 %v442, 2.0
        %v447 = vsub.f32 %v443, 2.0
        %v448 = vsub.f32 %v444, 2.0
        %v449 = vsel %vm293, 1, 0
        %v450 = vperm.slane %v449, 0
        %v451 = vperm.slane %v449, 1
        %v452 = vperm.slane %v449, 2
        %v453 = vperm.slane %v449, 3
        %vm454 = vcmp.eq.s32.totalorder %v450, 1
        %vm455 = vcmp.eq.s32.totalorder %v451, 1
        %vm456 = vcmp.eq.s32.totalorder %v452, 1
        %vm457 = vcmp.eq.s32.totalorder %v453, 1
        %v458 = vsel %vm454, %v445, %v245
        %v459 = vsel %vm455, %v446, %v260
        %v460 = vsel %vm456, %v447, %v275
        %v461 = vsel %vm457, %v448, %v290
        %vm462 = vcmp.eq.f32.partialorder %v458, 0.0
        %vm463 = vcmp.eq.f32.partialorder %v459, 0.0
        %vm464 = vcmp.eq.f32.partialorder %v460, 0.0
        %vm465 = vcmp.eq.f32.partialorder %v461, 0.0
        %v466 = vstv %s214
        %v467 = vsel %vm462, %v466, 0.0
        %v468 = vsel %vm463, %v466, 0.0
        %v469 = vsel %vm464, %v466, 0.0
        %v470 = vsel %vm465, %v466, 0.0
        %v471 = vadd.f32 %v467, 0.0
        %v472 = vadd.f32 %v468, 0.0
        %v473 = vadd.f32 %v469, 0.0
        %v474 = vadd.f32 %v470, 0.0
        %vm475 = vcmp.eq.f32.partialorder %v458, 1.0
        %vm476 = vcmp.eq.f32.partialorder %v459, 1.0
        %vm477 = vcmp.eq.f32.partialorder %v460, 1.0
        %vm478 = vcmp.eq.f32.partialorder %v461, 1.0
        %v479 = vstv %s216
        %v480 = vsel %vm475, %v479, 0.0
        %v481 = vsel %vm476, %v479, 0.0
        %v482 = vsel %vm477, %v479, 0.0
        %v483 = vsel %vm478, %v479, 0.0
        %v484 = vadd.f32 %v471, %v480
        %v485 = vadd.f32 %v472, %v481
        %v486 = vadd.f32 %v473, %v482
        %v487 = vadd.f32 %v474, %v483
        %v488 = vsel %vm294, 1, 0
        %v489 = vperm.slane %v488, 0
        %v490 = vperm.slane %v488, 1
        %v491 = vperm.slane %v488, 2
        %v492 = vperm.slane %v488, 3
        %vm493 = vcmp.eq.s32.totalorder %v489, 1
        %vm494 = vcmp.eq.s32.totalorder %v490, 1
        %vm495 = vcmp.eq.s32.totalorder %v491, 1
        %vm496 = vcmp.eq.s32.totalorder %v492, 1
        %v497 = vsel %vm493, %v484, %v458
        %v498 = vsel %vm494, %v485, %v459
        %v499 = vsel %vm495, %v486, %v460
        %v500 = vsel %vm496, %v487, %v461
        %501 = vst [vmem:[%s209] sm:$0xff] %v497
        %502 = vst [vmem:[%s209 + $0x8] sm:$0xff] %v498
        %503 = vst [vmem:[%s209 + $0x10] sm:$0xff] %v499
        %504 = vst [vmem:[%s209 + $0x18] sm:$0xff] %v500
        %s505 = sand.u32 %s91, 1
        %s506 = scalar_lea.sflag [#allocation6], %s505
        %s507 = sand.u32 %s91, 1
        %s508 = smul.addr %s507, 32
        %s509 = scalar_lea.vmem [#allocation9], %s508
        // Predicated region
        $region37: #{tpu_custom_call.1} parent=27 // pred_check
          %p510 = pneg %p101
        $region38: #{tpu_custom_call.1} parent=27 // pred_check_branch
          %512 = sbr.rel (%p510) target = $region40
        $region39: #{tpu_custom_call.1} parent=27 // pred_region
          %s513 = smul.u32 4, %s31
          %515 = vsyncadd %s506, 0
          %s516 = smul.addr %s513, 8
          %s517 = scalar_lea.hbm %s3, %s516
          %s519 = sshll.u32 %s509, 4
          %s520 = int_to_ptr.vmem [resolvable:$true] %s519
          %s521 = sshll.u32 %s517, 4
          %s522 = int_to_ptr.hbm [resolvable:$true] %s521
          %524 = dma.vmem_to_hbm [thread:$0]  %s520, 512, %s522, %s506
        $region40: #{tpu_custom_call.1} parent=27 // pred_fallthru
          _
      $region28: #{tpu_custom_call.1} parent=5 // pred_fallthru
        _
      %p525 = scmp.le.s32.totalorder 2, %s26
      // Predicated region
      $region41: #{tpu_custom_call.1} parent=5 // pred_check
        %p526 = pneg %p525
      $region42: #{tpu_custom_call.1} parent=5 // pred_check_branch
        %528 = sbr.rel (%p526) target = $region44
      $region43: #{tpu_custom_call.1} parent=5 // pred_region
        %s529 = ssub.s32 %s26, 2
        // Predicated region
        $region45: #{tpu_custom_call.1} parent=43 // pred_check
          %p530 = pneg %p107
        $region46: #{tpu_custom_call.1} parent=43 // pred_check_branch
          %532 = sbr.rel (%p530) target = $region48
        $region47: #{tpu_custom_call.1} parent=43 // pred_region
          %s533 = sand.u32 %s92, 1
          %s534 = scalar_lea.sflag [#allocation6], %s533
          %s535 = sand.u32 %s92, 1
          %s536 = smul.addr %s535, 32
          %s537 = scalar_lea.vmem [#allocation9], %s536
          %539 = dma.done %s534, 512
        $region48: #{tpu_custom_call.1} parent=43 // pred_fallthru
          _
      $region44: #{tpu_custom_call.1} parent=5 // pred_fallthru
        _
    $region6: #{tpu_custom_call.1} parent=1 // loop_footer
      %s30 = sadd.s32 1, %s26
    $region7: #{tpu_custom_call.1} parent=1 // loop_footer_branch
      %25 = sbr.rel target = $region3
    $region8: #{tpu_custom_call.1} parent=1 // loop_exit
      _
    %540 = vsyncpa [#allocation5], 1
    %s541 = scalar_lea.sflag [#allocation5], 1
    %542 = vsyncpa %s541, 1
    %543 = vsyncpa [#allocation8], 1
    %s544 = scalar_lea.sflag [#allocation8], 1
    %545 = vsyncpa %s544, 1
    %546 = vsyncpa [#allocation6], 1
    %s547 = scalar_lea.sflag [#allocation6], 1
    %548 = vsyncpa %s547, 1

</llo_original>
